<compile_context>
chip_gen: v6e
topology: v6e:2x2x1
jax: 0.10.0
libtpu: 0.0.40
codegen_flags: <defaults>
</compile_context>

<pallas_src>
import functools

import jax
import jax.numpy as jnp
from jax import lax
from jax.experimental import pallas as pl
from jax.experimental.pallas import tpu as pltpu


def _sims_kernel(a_ref, bt_ref, sqr_ref, sqc_ref, o_ref, *, neg_inv_f):
    """One (tm, tn) tile of exp(-||x_i - x_j||_2 / F); diagonal zeroed on diagonal tiles."""
    # Gram tile on the MXU: (tm, F) x (F, tn) -> (tm, tn), f32 accumulate.
    gram = jnp.dot(a_ref[...], bt_ref[...], preferred_element_type=jnp.float32)
    # ||a-b||^2 = |a|^2 + |b|^2 - 2<a,b>; norms arrive pre-shaped -> broadcast add (VPU).
    d2 = jnp.maximum(sqr_ref[...] + sqc_ref[...] - 2.0 * gram, 0.0)
    sims = jnp.exp(jnp.sqrt(d2) * jnp.float32(neg_inv_f))  # sqrt/exp on EUP, mul co-issues

    is_diag = pl.program_id(0) == pl.program_id(1)

    @pl.when(jnp.logical_not(is_diag))
    def _():
        o_ref[...] = sims  # single unmasked lane-dense store

    # ignore_self_loops=True -> zero the diagonal; only diagonal tiles pay the iota/where.
    @pl.when(is_diag)
    def _():
        row = lax.broadcasted_iota(jnp.int32, sims.shape, 0)
        col = lax.broadcasted_iota(jnp.int32, sims.shape, 1)
        o_ref[...] = jnp.where(row == col, jnp.float32(0.0), sims)


def compute_sims_pallas(x):
    """x: (N, F) float32 -> sims: (N, N) float32 with zero diagonal."""
    N, F = x.shape
    Np = ((N + 127) // 128) * 128            # lane-dense (multiple-of-128) padded size

    xp = x.astype(jnp.float32)
    if Np != N:
        xp = jnp.zeros((Np, F), jnp.float32).at[:N, :].set(xp)

    # Hoisted out of the kernel: transpose and squared row-norms are computed once by
    # XLA, not re-done per tile inside the kernel.
    xt = xp.T                                            # (F, Np)  RHS operand, no in-kernel .T
    sq_row = jnp.sum(xp * xp, axis=-1, keepdims=True)    # (Np, 1)
    sq_col = sq_row.T                                    # (1, Np)

    # MXU-native tiles; Np is a multiple of 128 so 128 always divides.
    tm = tn = 256 if (Np % 256 == 0) else 128
    grid = (Np // tm, Np // tn)

    kernel = functools.partial(_sims_kernel, neg_inv_f=-1.0 / float(F))

    out = pl.pallas_call(
        kernel,
        out_shape=jax.ShapeDtypeStruct((Np, Np), jnp.float32),
        grid=grid,
        in_specs=[
            pl.BlockSpec((tm, F), lambda i, j: (i, 0)),   # row tile of x
            pl.BlockSpec((F, tn), lambda i, j: (0, j)),   # col tile of x^T
            pl.BlockSpec((tm, 1), lambda i, j: (i, 0)),   # row norms
            pl.BlockSpec((1, tn), lambda i, j: (0, j)),   # col norms (pre-transposed)
        ],
        out_specs=pl.BlockSpec((tm, tn), lambda i, j: (i, j)),
        compiler_params=pltpu.CompilerParams(
            dimension_semantics=("parallel", "parallel"),
            vmem_limit_bytes=64 * 1024 * 1024,
        ),
        cost_estimate=pl.CostEstimate(
            flops=2 * Np * Np * F + 4 * Np * Np,
            transcendentals=2 * Np * Np,                 # sqrt + exp per element
            bytes_accessed=2 * Np * F * 4 + 2 * Np * 4 + Np * Np * 4,
        ),
    )(xp, xt, sq_row, sq_col)

    # Padded rows/cols never enter the edge construction.
    return out[:N, :N]


@functools.partial(jax.jit, static_argnames=("k_frac",))
def graph_constructor_forward(x, k_frac=1.0):
    """Full GraphConstructor.forward for method ['top-k', 'Minkowski-2', k_frac]."""
    N, _ = x.shape
    sims = compute_sims_pallas(x)

    # ---- sims_to_edges (glue; selection / index unraveling in plain JAX) ----
    k = int(k_frac * N * N + 0.5)
    flat = sims.reshape(-1)

    if k >= N * N:
        # k == N^2: torch.topk is just a full descending sort of the flattened sims.
        k = N * N
        indices = jnp.argsort(-flat)
        values = flat[indices]
        W = sims                                   # no masking branch when k == N^2
    else:
        values, indices = lax.top_k(flat, k)       # descending, like torch.topk
        # TODO(synk): scatter-built mask matches torch exactly but serializes on TPU;
        # only reached when k_frac < 1 (not the default configuration).
        M = jnp.zeros((N, N), jnp.float32).at[indices // N, indices % N].set(1.0)
        W = M * sims

    edge_index = jnp.stack([indices // N, indices % N], 0).astype(jnp.int32)  # (2, k)
    edge_weight = values                                                      # (k,)

    return {
        "edge_index": edge_index,
        "edge_weight": edge_weight,
        "orig_edge_weight": None,   # orig_edge_index not provided
        "W": W,
    }


if __name__ == "__main__":
    # Small shapes: N=16 spatial nodes, F=32 features (module's 2-D x path).
    key = jax.random.PRNGKey(0)
    N, F = 16, 32
    x = jax.random.normal(key, (N, F), dtype=jnp.float32)

    out = graph_constructor_forward(x)
    jax.block_until_ready(out["W"])
    jax.block_until_ready(out["edge_index"])
    jax.block_until_ready(out["edge_weight"])

    # Lightweight correctness check against a plain-JAX reference.
    d_ref = jnp.sqrt(jnp.maximum(
        jnp.sum((x[:, None, :] - x[None, :, :]) ** 2, -1), 0.0))
    sims_ref = jnp.exp(-d_ref / F)
    sims_ref = sims_ref * (1.0 - jnp.eye(N, dtype=jnp.float32))

    assert jnp.allclose(out["W"], sims_ref, atol=1e-5), "similarity mismatch"
    assert out["edge_index"].shape == (2, N * N)
    assert out["edge_weight"].shape == (N * N,)
    # edge_weight must be the descending sort of sims
    assert jnp.allclose(out["edge_weight"],
                        jnp.sort(sims_ref.reshape(-1))[::-1], atol=1e-5)
    # edge_index must point at the weights it claims
    gathered = sims_ref[out["edge_index"][0], out["edge_index"][1]]
    assert jnp.allclose(gathered, out["edge_weight"], atol=1e-5)

    print("KERNEL_OK")
</pallas_src>

<mosaic_0001>
module attributes {stable_mosaic.version = 11 : i64} {
  func.func @_sims_kernel(%arg0: i32, %arg1: i32, %arg2: memref<128x32xf32, #tpu.memory_space<vmem>>, %arg3: memref<32x128xf32, #tpu.memory_space<vmem>>, %arg4: memref<128x1xf32, #tpu.memory_space<vmem>>, %arg5: memref<1x128xf32, #tpu.memory_space<vmem>>, %arg6: memref<128x128xf32, #tpu.memory_space<vmem>>) attributes {dimension_semantics = [#tpu.dimension_semantics<parallel>, #tpu.dimension_semantics<parallel>], iteration_bounds = array<i64: 1, 1>, scalar_prefetch = 0 : i64, scratch_operands = 0 : i64, tpu.core_type = #tpu.core_type<tc>, window_params = [{transform_indices = @transform_0, window_bounds = array<i64: 128, 32>}, {transform_indices = @transform_1, window_bounds = array<i64: 32, 128>}, {transform_indices = @transform_2, window_bounds = array<i64: 128, 1>}, {transform_indices = @transform_3, window_bounds = array<i64: 1, 128>}, {transform_indices = @transform_4, window_bounds = array<i64: 128, 128>}]} {
    %c0 = arith.constant 0 : index
    %c0_0 = arith.constant 0 : index
    %0 = vector.load %arg2[%c0, %c0_0] : memref<128x32xf32, #tpu.memory_space<vmem>>, vector<128x32xf32>
    %c0_1 = arith.constant 0 : index
    %c0_2 = arith.constant 0 : index
    %1 = vector.load %arg3[%c0_1, %c0_2] : memref<32x128xf32, #tpu.memory_space<vmem>>, vector<32x128xf32>
    %cst = arith.constant dense<0.000000e+00> : vector<128x128xf32>
    %2 = tpu.matmul %0, %1, %cst {dimension_numbers = #tpu.dot_dimension_numbers<[1], [0], [0], [1], [0, 0, 1, 1], [], []>} : vector<128x32xf32>, vector<32x128xf32>, vector<128x128xf32> -> vector<128x128xf32>
    %c0_3 = arith.constant 0 : index
    %c0_4 = arith.constant 0 : index
    %3 = vector.load %arg4[%c0_3, %c0_4] : memref<128x1xf32, #tpu.memory_space<vmem>>, vector<128x1xf32>
    %c0_5 = arith.constant 0 : index
    %c0_6 = arith.constant 0 : index
    %4 = vector.load %arg5[%c0_5, %c0_6] : memref<1x128xf32, #tpu.memory_space<vmem>>, vector<1x128xf32>
    %5 = vector.broadcast %3 : vector<128x1xf32> to vector<128x128xf32>
    %6 = vector.broadcast %4 : vector<1x128xf32> to vector<128x128xf32>
    %7 = arith.addf %5, %6 : vector<128x128xf32>
    %cst_7 = arith.constant 2.000000e+00 : f32
    %8 = vector.broadcast %cst_7 : f32 to vector<128x128xf32>
    %9 = arith.mulf %8, %2 : vector<128x128xf32>
    %10 = arith.subf %7, %9 : vector<128x128xf32>
    %cst_8 = arith.constant 0.000000e+00 : f32
    %11 = vector.broadcast %cst_8 : f32 to vector<128x128xf32>
    %12 = arith.maximumf %10, %11 : vector<128x128xf32>
    %13 = math.sqrt %12 : vector<128x128xf32>
    %cst_9 = arith.constant -3.125000e-02 : f32
    %14 = vector.broadcast %cst_9 : f32 to vector<128x128xf32>
    %15 = arith.mulf %13, %14 : vector<128x128xf32>
    %16 = math.exp %15 : vector<128x128xf32>
    %17 = arith.cmpi eq, %arg0, %arg1 : i32
    %true = arith.constant true
    %18 = arith.xori %17, %true : i1
    %19 = arith.extui %18 : i1 to i32
    %c0_i32 = arith.constant 0 : i32
    %20 = arith.cmpi ne, %19, %c0_i32 : i32
    scf.if %20 {
      %c0_11 = arith.constant 0 : index
      %c0_12 = arith.constant 0 : index
      %23 = vector.load %arg6[%c0_11, %c0_12] : memref<128x128xf32, #tpu.memory_space<vmem>>, vector<128x128xf32>
      tpu.vector_store %arg6[%c0_11, %c0_12], %16 {strides = array<i32>} : memref<128x128xf32, #tpu.memory_space<vmem>>, vector<128x128xf32>,
    } else {
    }
    %21 = arith.extui %17 : i1 to i32
    %c0_i32_10 = arith.constant 0 : i32
    %22 = arith.cmpi ne, %21, %c0_i32_10 : i32
    scf.if %22 {
      %23 = tpu.iota {dimensions = array<i32: 0>} : vector<128x128xi32>
      %24 = tpu.iota {dimensions = array<i32: 1>} : vector<128x128xi32>
      %25 = arith.cmpi eq, %23, %24 : vector<128x128xi32>
      %cst_11 = arith.constant 0.000000e+00 : f32
      %26 = vector.broadcast %cst_11 : f32 to vector<128x128xf32>
      %27 = arith.select %25, %26, %16 : vector<128x128xi1>, vector<128x128xf32>
      %c0_12 = arith.constant 0 : index
      %c0_13 = arith.constant 0 : index
      %28 = vector.load %arg6[%c0_12, %c0_13] : memref<128x128xf32, #tpu.memory_space<vmem>>, vector<128x128xf32>
      tpu.vector_store %arg6[%c0_12, %c0_13], %27 {strides = array<i32>} : memref<128x128xf32, #tpu.memory_space<vmem>>, vector<128x128xf32>,
    } else {
    }
    return
  }
  func.func @transform_0(%arg0: i32, %arg1: i32) -> (i32, i32) {
    %c0_i32 = arith.constant 0 : i32
    %c0_i32_0 = arith.constant 0 : i32
    return %arg0, %c0_i32 : i32, i32
  }
  func.func @transform_1(%arg0: i32, %arg1: i32) -> (i32, i32) {
    %c0_i32 = arith.constant 0 : i32
    %c0_i32_0 = arith.constant 0 : i32
    return %c0_i32, %arg1 : i32, i32
  }
  func.func @transform_2(%arg0: i32, %arg1: i32) -> (i32, i32) {
    %c0_i32 = arith.constant 0 : i32
    %c0_i32_0 = arith.constant 0 : i32
    return %arg0, %c0_i32 : i32, i32
  }
  func.func @transform_3(%arg0: i32, %arg1: i32) -> (i32, i32) {
    %c0_i32 = arith.constant 0 : i32
    %c0_i32_0 = arith.constant 0 : i32
    return %c0_i32, %arg1 : i32, i32
  }
  func.func @transform_4(%arg0: i32, %arg1: i32) -> (i32, i32) {
    %c0_i32 = arith.constant 0 : i32
    return %arg0, %arg1 : i32, i32
  }
}

</mosaic_0001>

<llo_original>
// kernel: neg.1
$region0: #{neg.1}
  #allocation0 [shape = 's32[1]{0}', space=sflag, size = 0x4, scoped, tag = 'scoped memory for neg.1']
  %s0 = inlined_call_operand.vmem [shape: f32[256], index: 0, kind: input, shape index: {}]
  %s1 = inlined_call_operand.vmem [shape: f32[256], index: 1, kind: output, shape index: {}]
  %v2 = vld [vmem:[%s0] sm:$0x3]
  %3 = xla_tuple %v2
  %4 = xla_tuple %3
  %v5 = vxor.u32 %v2, 2147483648
  %6 = xla_tuple %v5
  %7 = vst [vmem:[%s1] sm:$0x3] %v5

// kernel: graph_constructor_forward.1
$region0: #{graph_constructor_forward.1}
  #allocation0 [shape = 'u32[]', space=smem, size = 0x4, offset = 0x4, fixed_abs, tag = 'smem constant byte address 0x4 - core index']
  #allocation1 [shape = 'u32[144,128]{1,0:T(1,128)}', space=vmem, size = 0x12000, scoped, tag = 'internal scratch']
  %s0 = inlined_call_operand.vmem [shape: f32[128,32], index: 0, kind: input, shape index: {}]
  %s1 = inlined_call_operand.vmem [shape: f32[32,128], index: 1, kind: input, shape index: {}]
  %s2 = inlined_call_operand.vmem [shape: f32[128,1], index: 2, kind: input, shape index: {}]
  %s3 = inlined_call_operand.vmem [shape: f32[1,128], index: 3, kind: input, shape index: {}]
  %s4 = inlined_call_operand.vmem [shape: f32[128,128], index: 4, kind: output, shape index: {}]
  %s5 = sld [smem:[#allocation0]]
  $region34: #{graph_constructor_forward.1} parent=0
    _
  %s7 = ssub.s32 1, %s5
  %s8 = scalar_select 0, %s7, %s5
  // Predicated region
  $region2: #{graph_constructor_forward.1} parent=0 // pred_check
    _
  $region3: #{graph_constructor_forward.1} parent=0 // pred_check_branch
    %10 = sbr.rel (0) target = $region5
  $region4: #{graph_constructor_forward.1} parent=0 // pred_region
    _
  $region5: #{graph_constructor_forward.1} parent=0 // pred_fallthru
    _
  // Predicated region
  $region6: #{graph_constructor_forward.1} parent=0 // pred_check
    _
  $region7: #{graph_constructor_forward.1} parent=0 // pred_check_branch
    %12 = sbr.rel (0) target = $region9
  $region8: #{graph_constructor_forward.1} parent=0 // pred_region
    _
  $region9: #{graph_constructor_forward.1} parent=0 // pred_fallthru
    _
  // Predicated region
  $region10: #{graph_constructor_forward.1} parent=0 // pred_check
    _
  $region11: #{graph_constructor_forward.1} parent=0 // pred_check_branch
    %14 = sbr.rel (0) target = $region13
  $region12: #{graph_constructor_forward.1} parent=0 // pred_region
    _
  $region13: #{graph_constructor_forward.1} parent=0 // pred_fallthru
    _
  // Predicated region
  $region14: #{graph_constructor_forward.1} parent=0 // pred_check
    _
  $region15: #{graph_constructor_forward.1} parent=0 // pred_check_branch
    %16 = sbr.rel (0) target = $region17
  $region16: #{graph_constructor_forward.1} parent=0 // pred_region
    _
  $region17: #{graph_constructor_forward.1} parent=0 // pred_fallthru
    _
  %v17 = vld [vmem:[%s0] sm:$0xff]
  %v18 = vld [vmem:[%s0 + $0x8] sm:$0xff]
  %v19 = vld [vmem:[%s0 + $0x10] sm:$0xff]
  %v20 = vld [vmem:[%s0 + $0x18] sm:$0xff]
  %v21 = vld [vmem:[%s0 + $0x20] sm:$0xff]
  %v22 = vld [vmem:[%s0 + $0x28] sm:$0xff]
  %v23 = vld [vmem:[%s0 + $0x30] sm:$0xff]
  %v24 = vld [vmem:[%s0 + $0x38] sm:$0xff]
  %v25 = vld [vmem:[%s0 + $0x40] sm:$0xff]
  %v26 = vld [vmem:[%s0 + $0x48] sm:$0xff]
  %v27 = vld [vmem:[%s0 + $0x50] sm:$0xff]
  %v28 = vld [vmem:[%s0 + $0x58] sm:$0xff]
  %v29 = vld [vmem:[%s0 + $0x60] sm:$0xff]
  %v30 = vld [vmem:[%s0 + $0x68] sm:$0xff]
  %v31 = vld [vmem:[%s0 + $0x70] sm:$0xff]
  %v32 = vld [vmem:[%s0 + $0x78] sm:$0xff]
  %v33 = vld [vmem:[%s1] sm:$0xff]
  %v34 = vld [vmem:[%s1 + $0x8] sm:$0xff]
  %v35 = vld [vmem:[%s1 + $0x10] sm:$0xff]
  %v36 = vld [vmem:[%s1 + $0x18] sm:$0xff]
  %vm37 = vcmask 261120
  %v39 = vsel %vm37, %v17, 0
  %v42 = vsel %vm37, %v18, 0
  %v45 = vsel %vm37, %v19, 0
  %v48 = vsel %vm37, %v20, 0
  %v51 = vsel %vm37, %v21, 0
  %v54 = vsel %vm37, %v22, 0
  %v57 = vsel %vm37, %v23, 0
  %v60 = vsel %vm37, %v24, 0
  %v63 = vsel %vm37, %v25, 0
  %v66 = vsel %vm37, %v26, 0
  %v69 = vsel %vm37, %v27, 0
  %v72 = vsel %vm37, %v28, 0
  %v75 = vsel %vm37, %v29, 0
  %v78 = vsel %vm37, %v30, 0
  %v81 = vsel %vm37, %v31, 0
  %v84 = vsel %vm37, %v32, 0
  %86 = vmatprep.subr.mxu0 0.0
  %87 = vmatpush1.msra.mxu0 0.0
  %88 = vmatprep.subr.mxu0 0.0
  %89 = vmatpush1.msra.mxu0 0.0
  %90 = vmatprep.subr.mxu0 0.0
  %91 = vmatpush1.msra.mxu0 0.0
  %92 = vmatprep.subr.mxu0 0.0
  %93 = vmatpush1.msra.mxu0 0.0
  %94 = vmatprep.subr.mxu0 0.0
  %95 = vmatpush1.msra.mxu0 0.0
  %96 = vmatprep.subr.mxu0 0.0
  %97 = vmatpush1.msra.mxu0 0.0
  %98 = vmatprep.subr.mxu0 0.0
  %99 = vmatpush1.msra.mxu0 0.0
  %100 = vmatprep.subr.mxu0 0.0
  %101 = vmatpush1.msra.mxu0 0.0
  %102 = vmatprep.subr.mxu0 0.0
  %103 = vmatpush1.msra.mxu0 0.0
  %104 = vmatprep.subr.mxu0 0.0
  %105 = vmatpush1.msra.mxu0 0.0
  %106 = vmatprep.subr.mxu0 0.0
  %107 = vmatpush1.msra.mxu0 0.0
  %108 = vmatprep.subr.mxu0 0.0
  %109 = vmatpush1.msra.mxu0 0.0
  %110 = vmatprep.subr.mxu0 0.0
  %111 = vmatpush1.msra.mxu0 %v36
  %112 = vmatprep.subr.mxu0 0.0
  %113 = vmatpush1.msra.mxu0 %v35
  %114 = vmatprep.subr.mxu0 0.0
  %115 = vmatpush1.msra.mxu0 %v34
  %116 = vmatprep.subr.mxu0 0.0
  %117 = vmatpush1.msra.mxu0 %v33
  %118 = vmatprep.subr.mxu0 0.0
  %119 = vmatpush2.msra.mxu0 0.0
  %120 = vmatprep.subr.mxu0 0.0
  %121 = vmatpush2.msra.mxu0 0.0
  %122 = vmatprep.subr.mxu0 0.0
  %123 = vmatpush2.msra.mxu0 0.0
  %124 = vmatprep.subr.mxu0 0.0
  %125 = vmatpush2.msra.mxu0 0.0
  %126 = vmatprep.subr.mxu0 0.0
  %127 = vmatpush2.msra.mxu0 0.0
  %128 = vmatprep.subr.mxu0 0.0
  %129 = vmatpush2.msra.mxu0 0.0
  %130 = vmatprep.subr.mxu0 0.0
  %131 = vmatpush2.msra.mxu0 0.0
  %132 = vmatprep.subr.mxu0 0.0
  %133 = vmatpush2.msra.mxu0 0.0
  %134 = vmatprep.subr.mxu0 0.0
  %135 = vmatpush2.msra.mxu0 0.0
  %136 = vmatprep.subr.mxu0 0.0
  %137 = vmatpush2.msra.mxu0 0.0
  %138 = vmatprep.subr.mxu0 0.0
  %139 = vmatpush2.msra.mxu0 0.0
  %140 = vmatprep.subr.mxu0 0.0
  %141 = vmatpush2.msra.mxu0 0.0
  %142 = vmatprep.subr.mxu0 0.0
  %143 = vmatpush2.msra.mxu0 0.0
  %144 = vmatprep.subr.mxu0 0.0
  %145 = vmatpush2.msra.mxu0 0.0
  %146 = vmatprep.subr.mxu0 0.0
  %147 = vmatpush2.msra.mxu0 0.0
  %148 = vmatprep.subr.mxu0 0.0
  %149 = vmatpush2.msra.mxu0 0.0
  %150 = vmatprep.mubr.f32.mxu0 0.0
  %151 = vmatmul.mubr.f32.gmra.mxu0 %v39
  %v152 = vpop.f32.mrf.mxu0
  %v153 = vadd.f32 0.0, %v152
  %v154 = vpop.f32.mrf.mxu0
  %155 = vmatprep.mubr.f32.mxu0 0.0
  %156 = vmatmul.mubr.f32.gmra.mxu0 %v42
  %v157 = vpop.f32.mrf.mxu0
  %v158 = vadd.f32 0.0, %v157
  %v159 = vpop.f32.mrf.mxu0
  %160 = vmatprep.mubr.f32.mxu0 0.0
  %161 = vmatmul.mubr.f32.gmra.mxu0 %v45
  %v162 = vpop.f32.mrf.mxu0
  %v163 = vadd.f32 0.0, %v162
  %v164 = vpop.f32.mrf.mxu0
  %165 = vmatprep.mubr.f32.mxu0 0.0
  %166 = vmatmul.mubr.f32.gmra.mxu0 %v48
  %v167 = vpop.f32.mrf.mxu0
  %v168 = vadd.f32 0.0, %v167
  %v169 = vpop.f32.mrf.mxu0
  %170 = vmatprep.mubr.f32.mxu0 0.0
  %171 = vmatmul.mubr.f32.gmra.mxu0 %v51
  %v172 = vpop.f32.mrf.mxu0
  %v173 = vadd.f32 0.0, %v172
  %v174 = vpop.f32.mrf.mxu0
  %175 = vmatprep.mubr.f32.mxu0 0.0
  %176 = vmatmul.mubr.f32.gmra.mxu0 %v54
  %v177 = vpop.f32.mrf.mxu0
  %v178 = vadd.f32 0.0, %v177
  %v179 = vpop.f32.mrf.mxu0
  %180 = vmatprep.mubr.f32.mxu0 0.0
  %181 = vmatmul.mubr.f32.gmra.mxu0 %v57
  %v182 = vpop.f32.mrf.mxu0
  %v183 = vadd.f32 0.0, %v182
  %v184 = vpop.f32.mrf.mxu0
  %185 = vmatprep.mubr.f32.mxu0 0.0
  %186 = vmatmul.mubr.f32.gmra.mxu0 %v60
  %v187 = vpop.f32.mrf.mxu0
  %v188 = vadd.f32 0.0, %v187
  %v189 = vpop.f32.mrf.mxu0
  %190 = vmatprep.mubr.f32.mxu0 0.0
  %191 = vmatmul.mubr.f32.gmra.mxu0 %v63
  %v192 = vpop.f32.mrf.mxu0
  %v193 = vadd.f32 0.0, %v192
  %v194 = vpop.f32.mrf.mxu0
  %195 = vmatprep.mubr.f32.mxu0 0.0
  %196 = vmatmul.mubr.f32.gmra.mxu0 %v66
  %v197 = vpop.f32.mrf.mxu0
  %v198 = vadd.f32 0.0, %v197
  %v199 = vpop.f32.mrf.mxu0
  %200 = vmatprep.mubr.f32.mxu0 0.0
  %201 = vmatmul.mubr.f32.gmra.mxu0 %v69
  %v202 = vpop.f32.mrf.mxu0
  %v203 = vadd.f32 0.0, %v202
  %v204 = vpop.f32.mrf.mxu0
  %205 = vmatprep.mubr.f32.mxu0 0.0
  %206 = vmatmul.mubr.f32.gmra.mxu0 %v72
  %v207 = vpop.f32.mrf.mxu0
  %v208 = vadd.f32 0.0, %v207
  %v209 = vpop.f32.mrf.mxu0
  %210 = vmatprep.mubr.f32.mxu0 0.0
  %211 = vmatmul.mubr.f32.gmra.mxu0 %v75
  %v212 = vpop.f32.mrf.mxu0
  %v213 = vadd.f32 0.0, %v212
  %v214 = vpop.f32.mrf.mxu0
  %215 = vmatprep.mubr.f32.mxu0 0.0
  %216 = vmatmul.mubr.f32.gmra.mxu0 %v78
  %v217 = vpop.f32.mrf.mxu0
  %v218 = vadd.f32 0.0, %v217
  %v219 = vpop.f32.mrf.mxu0
  %220 = vmatprep.mubr.f32.mxu0 0.0
  %221 = vmatmul.mubr.f32.gmra.mxu0 %v81
  %v222 = vpop.f32.mrf.mxu0
  %v223 = vadd.f32 0.0, %v222
  %v224 = vpop.f32.mrf.mxu0
  %225 = vmatprep.mubr.f32.mxu0 0.0
  %226 = vmatmul.mubr.f32.gmra.mxu0 %v84
  %v227 = vpop.f32.mrf.mxu0
  %v228 = vadd.f32 0.0, %v227
  %v229 = vpop.f32.mrf.mxu0
  %230 = vdwg.mxu0
  %v231 = vld [vmem:[%s2] sm:$0xff]
  %v232 = vld [vmem:[%s2 + $0x8] sm:$0xff]
  %v233 = vld [vmem:[%s2 + $0x10] sm:$0xff]
  %v234 = vld [vmem:[%s2 + $0x18] sm:$0xff]
  %v235 = vld [vmem:[%s2 + $0x20] sm:$0xff]
  %v236 = vld [vmem:[%s2 + $0x28] sm:$0xff]
  %v237 = vld [vmem:[%s2 + $0x30] sm:$0xff]
  %v238 = vld [vmem:[%s2 + $0x38] sm:$0xff]
  %v239 = vld [vmem:[%s2 + $0x40] sm:$0xff]
  %v240 = vld [vmem:[%s2 + $0x48] sm:$0xff]
  %v241 = vld [vmem:[%s2 + $0x50] sm:$0xff]
  %v242 = vld [vmem:[%s2 + $0x58] sm:$0xff]
  %v243 = vld [vmem:[%s2 + $0x60] sm:$0xff]
  %v244 = vld [vmem:[%s2 + $0x68] sm:$0xff]
  %v245 = vld [vmem:[%s2 + $0x70] sm:$0xff]
  %v246 = vld [vmem:[%s2 + $0x78] sm:$0xff]
  %v247 = vld [vmem:[%s3] sm:$0x1]
  %249 = vset.pattern.permute.xlu0 0
  %250 = vperm.xlu0 %249, %v231
  %v251 = vpop.permute.xlu0 %250
  %254 = vset.pattern.permute.xlu0 0
  %255 = vperm.xlu0 %254, %v232
  %v256 = vpop.permute.xlu0 %255
  %259 = vset.pattern.permute.xlu0 0
  %260 = vperm.xlu0 %259, %v233
  %v261 = vpop.permute.xlu0 %260
  %264 = vset.pattern.permute.xlu0 0
  %265 = vperm.xlu0 %264, %v234
  %v266 = vpop.permute.xlu0 %265
  %269 = vset.pattern.permute.xlu0 0
  %270 = vperm.xlu0 %269, %v235
  %v271 = vpop.permute.xlu0 %270
  %274 = vset.pattern.permute.xlu0 0
  %275 = vperm.xlu0 %274, %v236
  %v276 = vpop.permute.xlu0 %275
  %279 = vset.pattern.permute.xlu0 0
  %280 = vperm.xlu0 %279, %v237
  %v281 = vpop.permute.xlu0 %280
  %284 = vset.pattern.permute.xlu0 0
  %285 = vperm.xlu0 %284, %v238
  %v286 = vpop.permute.xlu0 %285
  %289 = vset.pattern.permute.xlu0 0
  %290 = vperm.xlu0 %289, %v239
  %v291 = vpop.permute.xlu0 %290
  %294 = vset.pattern.permute.xlu0 0
  %295 = vperm.xlu0 %294, %v240
  %v296 = vpop.permute.xlu0 %295
  %299 = vset.pattern.permute.xlu0 0
  %300 = vperm.xlu0 %299, %v241
  %v301 = vpop.permute.xlu0 %300
  %304 = vset.pattern.permute.xlu0 0
  %305 = vperm.xlu0 %304, %v242
  %v306 = vpop.permute.xlu0 %305
  %309 = vset.pattern.permute.xlu0 0
  %310 = vperm.xlu0 %309, %v243
  %v311 = vpop.permute.xlu0 %310
  %314 = vset.pattern.permute.xlu0 0
  %315 = vperm.xlu0 %314, %v244
  %v316 = vpop.permute.xlu0 %315
  %319 = vset.pattern.permute.xlu0 0
  %320 = vperm.xlu0 %319, %v245
  %v321 = vpop.permute.xlu0 %320
  %324 = vset.pattern.permute.xlu0 0
  %325 = vperm.xlu0 %324, %v246
  %v326 = vpop.permute.xlu0 %325
  %v329 = vlaneseq
  %v330 = vshrl.u32 %v329, 7
  %v331 = vsub.s32 0, %v330
  %v332 = vrot.slane %v247, %v331
  %v334 = vadd.f32 %v251, %v332
  %v335 = vadd.f32 %v256, %v332
  %v336 = vadd.f32 %v261, %v332
  %v337 = vadd.f32 %v266, %v332
  %v338 = vadd.f32 %v271, %v332
  %v339 = vadd.f32 %v276, %v332
  %v340 = vadd.f32 %v281, %v332
  %v341 = vadd.f32 %v286, %v332
  %v342 = vadd.f32 %v291, %v332
  %v343 = vadd.f32 %v296, %v332
  %v344 = vadd.f32 %v301, %v332
  %v345 = vadd.f32 %v306, %v332
  %v346 = vadd.f32 %v311, %v332
  %v347 = vadd.f32 %v316, %v332
  %v348 = vadd.f32 %v321, %v332
  %v349 = vadd.f32 %v326, %v332
  %v350 = vmul.f32 %v153, 2.0
  %v351 = vmul.f32 %v158, 2.0
  %v352 = vmul.f32 %v163, 2.0
  %v353 = vmul.f32 %v168, 2.0
  %v354 = vmul.f32 %v173, 2.0
  %v355 = vmul.f32 %v178, 2.0
  %v356 = vmul.f32 %v183, 2.0
  %v357 = vmul.f32 %v188, 2.0
  %v358 = vmul.f32 %v193, 2.0
  %v359 = vmul.f32 %v198, 2.0
  %v360 = vmul.f32 %v203, 2.0
  %v361 = vmul.f32 %v208, 2.0
  %v362 = vmul.f32 %v213, 2.0
  %v363 = vmul.f32 %v218, 2.0
  %v364 = vmul.f32 %v223, 2.0
  %v365 = vmul.f32 %v228, 2.0
  %v366 = vsub.f32 %v334, %v350
  %v367 = vsub.f32 %v335, %v351
  %v368 = vsub.f32 %v336, %v352
  %v369 = vsub.f32 %v337, %v353
  %v370 = vsub.f32 %v338, %v354
  %v371 = vsub.f32 %v339, %v355
  %v372 = vsub.f32 %v340, %v356
  %v373 = vsub.f32 %v341, %v357
  %v374 = vsub.f32 %v342, %v358
  %v375 = vsub.f32 %v343, %v359
  %v376 = vsub.f32 %v344, %v360
  %v377 = vsub.f32 %v345, %v361
  %v378 = vsub.f32 %v346, %v362
  %v379 = vsub.f32 %v347, %v363
  %v380 = vsub.f32 %v348, %v364
  %v381 = vsub.f32 %v349, %v365
  %v382 = vmax.f32 %v366, 0.0
  %v383 = vmax.f32 %v367, 0.0
  %v384 = vmax.f32 %v368, 0.0
  %v385 = vmax.f32 %v369, 0.0
  %v386 = vmax.f32 %v370, 0.0
  %v387 = vmax.f32 %v371, 0.0
  %v388 = vmax.f32 %v372, 0.0
  %v389 = vmax.f32 %v373, 0.0
  %v390 = vmax.f32 %v374, 0.0
  %v391 = vmax.f32 %v375, 0.0
  %v392 = vmax.f32 %v376, 0.0
  %v393 = vmax.f32 %v377, 0.0
  %v394 = vmax.f32 %v378, 0.0
  %v395 = vmax.f32 %v379, 0.0
  %v396 = vmax.f32 %v380, 0.0
  %v397 = vmax.f32 %v381, 0.0
  %v398 = vrsqrt.pop %v382
  %v399 = vmul.f32 %v382, %v398
  %vm400 = vcmp.eq.f32.partialorder %v382, inf
  %v401 = vsel %vm400, %v382, %v399
  %vm402 = vcmp.eq.f32.partialorder %v382, 0.0
  %v403 = vand.u32 %v382, 2147483648
  %v404 = vsel %vm402, %v403, %v401
  %v405 = vrsqrt.pop %v383
  %v406 = vmul.f32 %v383, %v405
  %vm407 = vcmp.eq.f32.partialorder %v383, inf
  %v408 = vsel %vm407, %v383, %v406
  %vm409 = vcmp.eq.f32.partialorder %v383, 0.0
  %v410 = vand.u32 %v383, 2147483648
  %v411 = vsel %vm409, %v410, %v408
  %v412 = vrsqrt.pop %v384
  %v413 = vmul.f32 %v384, %v412
  %vm414 = vcmp.eq.f32.partialorder %v384, inf
  %v415 = vsel %vm414, %v384, %v413
  %vm416 = vcmp.eq.f32.partialorder %v384, 0.0
  %v417 = vand.u32 %v384, 2147483648
  %v418 = vsel %vm416, %v417, %v415
  %v419 = vrsqrt.pop %v385
  %v420 = vmul.f32 %v385, %v419
  %vm421 = vcmp.eq.f32.partialorder %v385, inf
  %v422 = vsel %vm421, %v385, %v420
  %vm423 = vcmp.eq.f32.partialorder %v385, 0.0
  %v424 = vand.u32 %v385, 2147483648
  %v425 = vsel %vm423, %v424, %v422
  %v426 = vrsqrt.pop %v386
  %v427 = vmul.f32 %v386, %v426
  %vm428 = vcmp.eq.f32.partialorder %v386, inf
  %v429 = vsel %vm428, %v386, %v427
  %vm430 = vcmp.eq.f32.partialorder %v386, 0.0
  %v431 = vand.u32 %v386, 2147483648
  %v432 = vsel %vm430, %v431, %v429
  %v433 = vrsqrt.pop %v387
  %v434 = vmul.f32 %v387, %v433
  %vm435 = vcmp.eq.f32.partialorder %v387, inf
  %v436 = vsel %vm435, %v387, %v434
  %vm437 = vcmp.eq.f32.partialorder %v387, 0.0
  %v438 = vand.u32 %v387, 2147483648
  %v439 = vsel %vm437, %v438, %v436
  %v440 = vrsqrt.pop %v388
  %v441 = vmul.f32 %v388, %v440
  %vm442 = vcmp.eq.f32.partialorder %v388, inf
  %v443 = vsel %vm442, %v388, %v441
  %vm444 = vcmp.eq.f32.partialorder %v388, 0.0
  %v445 = vand.u32 %v388, 2147483648
  %v446 = vsel %vm444, %v445, %v443
  %v447 = vrsqrt.pop %v389
  %v448 = vmul.f32 %v389, %v447
  %vm449 = vcmp.eq.f32.partialorder %v389, inf
  %v450 = vsel %vm449, %v389, %v448
  %vm451 = vcmp.eq.f32.partialorder %v389, 0.0
  %v452 = vand.u32 %v389, 2147483648
  %v453 = vsel %vm451, %v452, %v450
  %v454 = vrsqrt.pop %v390
  %v455 = vmul.f32 %v390, %v454
  %vm456 = vcmp.eq.f32.partialorder %v390, inf
  %v457 = vsel %vm456, %v390, %v455
  %vm458 = vcmp.eq.f32.partialorder %v390, 0.0
  %v459 = vand.u32 %v390, 2147483648
  %v460 = vsel %vm458, %v459, %v457
  %v461 = vrsqrt.pop %v391
  %v462 = vmul.f32 %v391, %v461
  %vm463 = vcmp.eq.f32.partialorder %v391, inf
  %v464 = vsel %vm463, %v391, %v462
  %vm465 = vcmp.eq.f32.partialorder %v391, 0.0
  %v466 = vand.u32 %v391, 2147483648
  %v467 = vsel %vm465, %v466, %v464
  %v468 = vrsqrt.pop %v392
  %v469 = vmul.f32 %v392, %v468
  %vm470 = vcmp.eq.f32.partialorder %v392, inf
  %v471 = vsel %vm470, %v392, %v469
  %vm472 = vcmp.eq.f32.partialorder %v392, 0.0
  %v473 = vand.u32 %v392, 2147483648
  %v474 = vsel %vm472, %v473, %v471
  %v475 = vrsqrt.pop %v393
  %v476 = vmul.f32 %v393, %v475
  %vm477 = vcmp.eq.f32.partialorder %v393, inf
  %v478 = vsel %vm477, %v393, %v476
  %vm479 = vcmp.eq.f32.partialorder %v393, 0.0
  %v480 = vand.u32 %v393, 2147483648
  %v481 = vsel %vm479, %v480, %v478
  %v482 = vrsqrt.pop %v394
  %v483 = vmul.f32 %v394, %v482
  %vm484 = vcmp.eq.f32.partialorder %v394, inf
  %v485 = vsel %vm484, %v394, %v483
  %vm486 = vcmp.eq.f32.partialorder %v394, 0.0
  %v487 = vand.u32 %v394, 2147483648
  %v488 = vsel %vm486, %v487, %v485
  %v489 = vrsqrt.pop %v395
  %v490 = vmul.f32 %v395, %v489
  %vm491 = vcmp.eq.f32.partialorder %v395, inf
  %v492 = vsel %vm491, %v395, %v490
  %vm493 = vcmp.eq.f32.partialorder %v395, 0.0
  %v494 = vand.u32 %v395, 2147483648
  %v495 = vsel %vm493, %v494, %v492
  %v496 = vrsqrt.pop %v396
  %v497 = vmul.f32 %v396, %v496
  %vm498 = vcmp.eq.f32.partialorder %v396, inf
  %v499 = vsel %vm498, %v396, %v497
  %vm500 = vcmp.eq.f32.partialorder %v396, 0.0
  %v501 = vand.u32 %v396, 2147483648
  %v502 = vsel %vm500, %v501, %v499
  %v503 = vrsqrt.pop %v397
  %v504 = vmul.f32 %v397, %v503
  %vm505 = vcmp.eq.f32.partialorder %v397, inf
  %v506 = vsel %vm505, %v397, %v504
  %vm507 = vcmp.eq.f32.partialorder %v397, 0.0
  %v508 = vand.u32 %v397, 2147483648
  %v509 = vsel %vm507, %v508, %v506
  %v510 = vmul.f32 %v404, -0.03125
  %v511 = vmul.f32 %v411, -0.03125
  %v512 = vmul.f32 %v418, -0.03125
  %v513 = vmul.f32 %v425, -0.03125
  %v514 = vmul.f32 %v432, -0.03125
  %v515 = vmul.f32 %v439, -0.03125
  %v516 = vmul.f32 %v446, -0.03125
  %v517 = vmul.f32 %v453, -0.03125
  %v518 = vmul.f32 %v460, -0.03125
  %v519 = vmul.f32 %v467, -0.03125
  %v520 = vmul.f32 %v474, -0.03125
  %v521 = vmul.f32 %v481, -0.03125
  %v522 = vmul.f32 %v488, -0.03125
  %v523 = vmul.f32 %v495, -0.03125
  %v524 = vmul.f32 %v502, -0.03125
  %v525 = vmul.f32 %v509, -0.03125
  %v526 = vmul.f32 %v510, 1.442695
  %v527 = vpow.pop %v526
  %v528 = vmul.f32 %v511, 1.442695
  %v529 = vpow.pop %v528
  %v530 = vmul.f32 %v512, 1.442695
  %v531 = vpow.pop %v530
  %v532 = vmul.f32 %v513, 1.442695
  %v533 = vpow.pop %v532
  %v534 = vmul.f32 %v514, 1.442695
  %v535 = vpow.pop %v534
  %v536 = vmul.f32 %v515, 1.442695
  %v537 = vpow.pop %v536
  %v538 = vmul.f32 %v516, 1.442695
  %v539 = vpow.pop %v538
  %v540 = vmul.f32 %v517, 1.442695
  %v541 = vpow.pop %v540
  %v542 = vmul.f32 %v518, 1.442695
  %v543 = vpow.pop %v542
  %v544 = vmul.f32 %v519, 1.442695
  %v545 = vpow.pop %v544
  %v546 = vmul.f32 %v520, 1.442695
  %v547 = vpow.pop %v546
  %v548 = vmul.f32 %v521, 1.442695
  %v549 = vpow.pop %v548
  %v550 = vmul.f32 %v522, 1.442695
  %v551 = vpow.pop %v550
  %v552 = vmul.f32 %v523, 1.442695
  %v553 = vpow.pop %v552
  %v554 = vmul.f32 %v524, 1.442695
  %v555 = vpow.pop %v554
  %v556 = vmul.f32 %v525, 1.442695
  %v557 = vpow.pop %v556
  %p558 = scmp.eq.s32.totalorder 0, 0
  %p559 = scmp.ne.s32.totalorder 0, 0
  // Predicated region
  $region18: #{graph_constructor_forward.1} parent=0 // pred_check
    %p560 = pneg %p559
  $region19: #{graph_constructor_forward.1} parent=0 // pred_check_branch
    %562 = sbr.rel (%p560) target = $region21
  $region20: #{graph_constructor_forward.1} parent=0 // pred_region
    %563 = vst [vmem:[%s4] sm:$0xff] %v527
    %564 = vst [vmem:[%s4 + $0x8] sm:$0xff] %v529
    %565 = vst [vmem:[%s4 + $0x10] sm:$0xff] %v531
    %566 = vst [vmem:[%s4 + $0x18] sm:$0xff] %v533
    %567 = vst [vmem:[%s4 + $0x20] sm:$0xff] %v535
    %568 = vst [vmem:[%s4 + $0x28] sm:$0xff] %v537
    %569 = vst [vmem:[%s4 + $0x30] sm:$0xff] %v539
    %570 = vst [vmem:[%s4 + $0x38] sm:$0xff] %v541
    %571 = vst [vmem:[%s4 + $0x40] sm:$0xff] %v543
    %572 = vst [vmem:[%s4 + $0x48] sm:$0xff] %v545
    %573 = vst [vmem:[%s4 + $0x50] sm:$0xff] %v547
    %574 = vst [vmem:[%s4 + $0x58] sm:$0xff] %v549
    %575 = vst [vmem:[%s4 + $0x60] sm:$0xff] %v551
    %576 = vst [vmem:[%s4 + $0x68] sm:$0xff] %v553
    %577 = vst [vmem:[%s4 + $0x70] sm:$0xff] %v555
    %578 = vst [vmem:[%s4 + $0x78] sm:$0xff] %v557
  $region21: #{graph_constructor_forward.1} parent=0 // pred_fallthru
    _
  // Predicated region
  $region22: #{graph_constructor_forward.1} parent=0 // pred_check
    %p579 = pneg %p558
  $region23: #{graph_constructor_forward.1} parent=0 // pred_check_branch
    %581 = sbr.rel (%p579) target = $region25
  $region24: #{graph_constructor_forward.1} parent=0 // pred_region
    %v582 = vlaneseq
    %v583 = vshrl.u32 %v582, 7
    %v584 = vadd.s32 %v583, 8
    %v585 = vadd.s32 %v583, 16
    %v586 = vadd.s32 %v583, 24
    %v587 = vadd.s32 %v583, 32
    %v588 = vadd.s32 %v583, 40
    %v589 = vadd.s32 %v583, 48
    %v590 = vadd.s32 %v583, 56
    %v591 = vadd.s32 %v583, 64
    %v592 = vadd.s32 %v583, 72
    %v593 = vadd.s32 %v583, 80
    %v594 = vadd.s32 %v583, 88
    %v595 = vadd.s32 %v583, 96
    %v596 = vadd.s32 %v583, 104
    %v597 = vadd.s32 %v583, 112
    %v598 = vadd.s32 %v583, 120
    %v599 = vlaneseq
    %v600 = vand.u32 %v599, 127
    %vm601 = vcmp.eq.s32.totalorder %v583, %v600
    %vm602 = vcmp.eq.s32.totalorder %v584, %v600
    %vm603 = vcmp.eq.s32.totalorder %v585, %v600
    %vm604 = vcmp.eq.s32.totalorder %v586, %v600
    %vm605 = vcmp.eq.s32.totalorder %v587, %v600
    %vm606 = vcmp.eq.s32.totalorder %v588, %v600
    %vm607 = vcmp.eq.s32.totalorder %v589, %v600
    %vm608 = vcmp.eq.s32.totalorder %v590, %v600
    %vm609 = vcmp.eq.s32.totalorder %v591, %v600
    %vm610 = vcmp.eq.s32.totalorder %v592, %v600
    %vm611 = vcmp.eq.s32.totalorder %v593, %v600
    %vm612 = vcmp.eq.s32.totalorder %v594, %v600
    %vm613 = vcmp.eq.s32.totalorder %v595, %v600
    %vm614 = vcmp.eq.s32.totalorder %v596, %v600
    %vm615 = vcmp.eq.s32.totalorder %v597, %v600
    %vm616 = vcmp.eq.s32.totalorder %v598, %v600
    %v617 = vsel %vm601, 0.0, %v527
    %v618 = vsel %vm602, 0.0, %v529
    %v619 = vsel %vm603, 0.0, %v531
    %v620 = vsel %vm604, 0.0, %v533
    %v621 = vsel %vm605, 0.0, %v535
    %v622 = vsel %vm606, 0.0, %v537
    %v623 = vsel %vm607, 0.0, %v539
    %v624 = vsel %vm608, 0.0, %v541
    %v625 = vsel %vm609, 0.0, %v543
    %v626 = vsel %vm610, 0.0, %v545
    %v627 = vsel %vm611, 0.0, %v547
    %v628 = vsel %vm612, 0.0, %v549
    %v629 = vsel %vm613, 0.0, %v551
    %v630 = vsel %vm614, 0.0, %v553
    %v631 = vsel %vm615, 0.0, %v555
    %v632 = vsel %vm616, 0.0, %v557
    %633 = vst [vmem:[%s4] sm:$0xff] %v617
    %634 = vst [vmem:[%s4 + $0x8] sm:$0xff] %v618
    %635 = vst [vmem:[%s4 + $0x10] sm:$0xff] %v619
    %636 = vst [vmem:[%s4 + $0x18] sm:$0xff] %v620
    %637 = vst [vmem:[%s4 + $0x20] sm:$0xff] %v621
    %638 = vst [vmem:[%s4 + $0x28] sm:$0xff] %v622
    %639 = vst [vmem:[%s4 + $0x30] sm:$0xff] %v623
    %640 = vst [vmem:[%s4 + $0x38] sm:$0xff] %v624
    %641 = vst [vmem:[%s4 + $0x40] sm:$0xff] %v625
    %642 = vst [vmem:[%s4 + $0x48] sm:$0xff] %v626
    %643 = vst [vmem:[%s4 + $0x50] sm:$0xff] %v627
    %644 = vst [vmem:[%s4 + $0x58] sm:$0xff] %v628
    %645 = vst [vmem:[%s4 + $0x60] sm:$0xff] %v629
    %646 = vst [vmem:[%s4 + $0x68] sm:$0xff] %v630
    %647 = vst [vmem:[%s4 + $0x70] sm:$0xff] %v631
    %648 = vst [vmem:[%s4 + $0x78] sm:$0xff] %v632
  $region25: #{graph_constructor_forward.1} parent=0 // pred_fallthru
    _
  // Predicated region
  $region26: #{graph_constructor_forward.1} parent=0 // pred_check
    _
  $region27: #{graph_constructor_forward.1} parent=0 // pred_check_branch
    %650 = sbr.rel (0) target = $region29
  $region28: #{graph_constructor_forward.1} parent=0 // pred_region
    _
  $region29: #{graph_constructor_forward.1} parent=0 // pred_fallthru
    _
  // Predicated region
  $region30: #{graph_constructor_forward.1} parent=0 // pred_check
    _
  $region31: #{graph_constructor_forward.1} parent=0 // pred_check_branch
    %652 = sbr.rel (0) target = $region33
  $region32: #{graph_constructor_forward.1} parent=0 // pred_region
    _
  $region33: #{graph_constructor_forward.1} parent=0 // pred_fallthru
    _

</llo_original>
